<compile_context>
chip_gen: v6e
topology: v6e:2x2x1
jax: 0.10.0
libtpu: 0.0.40
codegen_flags: <defaults>
</compile_context>

<pallas_src>
import functools

import jax
import jax.numpy as jnp
from jax import lax
from jax.experimental import pallas as pl
from jax.experimental.pallas import tpu as pltpu


# ---------------------------------------------------------------------------
# Pass 1: streamed channel max.  x tile (B, C, tn) -> w tile (B, tn).
# ---------------------------------------------------------------------------
def _channel_max_kernel(x_ref, w_ref):
    # Reduce over the channel axis in the input dtype (max is exact); cast once.
    w_ref[...] = jnp.max(x_ref[...], axis=1).astype(w_ref.dtype)


# ---------------------------------------------------------------------------
# Gate: factored power iteration on the small (B, N) matrix w.
#   v <- W^T (W v)  ==  (W^T W) v   without forming the N x N Gram matrix.
#   gate = sigmoid(u v^T),  u = W v.
# ---------------------------------------------------------------------------
def _gate_kernel(w_ref, v_ref, gate_ref, *, Ip):
    w = w_ref[...].astype(jnp.float32)                 # (B, N)
    v = v_ref[...].astype(jnp.float32)                 # (1, N), lane-dense
    for _ in range(Ip):                                # Ip is small & static
        t = jnp.sum(w * v, axis=1, keepdims=True)      # (B, 1)  = W v
        v = jnp.sum(w * t, axis=0, keepdims=True)      # (1, N)  = W^T (W v)
        nrm2 = jnp.sum(v * v, axis=1, keepdims=True)   # (1, 1)
        v = v * lax.rsqrt(nrm2)                        # EUP rsqrt (free slot)
    u = jnp.sum(w * v, axis=1, keepdims=True)          # (B, 1)  = W v
    gate_ref[...] = jax.nn.sigmoid(u * v).astype(gate_ref.dtype)   # (B, N)


# ---------------------------------------------------------------------------
# Pass 2: streamed gating.  out tile = x tile * gate[:, None, :].
# ---------------------------------------------------------------------------
def _gating_kernel(x_ref, g_ref, out_ref):
    g = g_ref[...]                                     # (B, tn) f32
    out_ref[...] = (x_ref[...] * g[:, None, :]).astype(out_ref.dtype)


# ---------------------------------------------------------------------------
# Wrapper: tiling / grid / compiler params.
# ---------------------------------------------------------------------------
def _pick_tile_n(B, C, N, itemsize, target_bytes=2 * 1024 * 1024):
    """Lane-dense N tile: multiple of 128 (or full N), ~target_bytes per x tile."""
    if N % 128 != 0:
        return N
    cap = (target_bytes // max(1, B * C * itemsize)) // 128 * 128
    return int(min(N, max(128, cap)))


def _vmem_limit(block_bytes, headroom=8 * 1024 * 1024):
    # 2 buffers per pipelined block (double-buffering) + headroom; keep the
    # limit within what every TPU gen (incl. v7x's 64 MiB VMEM) can grant.
    need = 2 * sum(block_bytes) + headroom
    return int(min(max(need, 24 * 1024 * 1024), 48 * 1024 * 1024))


def singular_spectrum_operator(x, v0, *, Ip=2, tile_n=None):
    """x: (B, C, N); v0: (1, N) power-iteration init.  Returns (B, C, N)."""
    B, C, N = x.shape
    itemsize = jnp.dtype(x.dtype).itemsize
    if tile_n is None:
        tile_n = _pick_tile_n(B, C, N, itemsize)
    grid_n = pl.cdiv(N, tile_n)

    x_blk_bytes = B * C * tile_n * itemsize
    w_blk_bytes = B * tile_n * 4

    # ---- pass 1: w = max(x, axis=1), streamed over N tiles ----
    w = pl.pallas_call(
        _channel_max_kernel,
        out_shape=jax.ShapeDtypeStruct((B, N), jnp.float32),
        grid=(grid_n,),
        in_specs=[pl.BlockSpec((B, C, tile_n), lambda i: (0, 0, i))],
        out_specs=pl.BlockSpec((B, tile_n), lambda i: (0, i)),
        compiler_params=pltpu.CompilerParams(
            dimension_semantics=("parallel",),
            vmem_limit_bytes=_vmem_limit([x_blk_bytes, w_blk_bytes])),
    )(x)

    # ---- gate: tiny (B, N) power iteration + sigmoid, whole-array in VMEM ----
    gate = pl.pallas_call(
        functools.partial(_gate_kernel, Ip=Ip),
        out_shape=jax.ShapeDtypeStruct((B, N), jnp.float32),
        in_specs=[pl.BlockSpec(memory_space=pltpu.MemorySpace.VMEM),
                  pl.BlockSpec(memory_space=pltpu.MemorySpace.VMEM)],
        out_specs=pl.BlockSpec(memory_space=pltpu.MemorySpace.VMEM),
    )(w, v0)

    # ---- pass 2: out = sigmoid(W_hat) * x, streamed over N tiles ----
    out = pl.pallas_call(
        _gating_kernel,
        out_shape=jax.ShapeDtypeStruct((B, C, N), x.dtype),
        grid=(grid_n,),
        in_specs=[pl.BlockSpec((B, C, tile_n), lambda i: (0, 0, i)),
                  pl.BlockSpec((B, tile_n), lambda i: (0, i))],
        out_specs=pl.BlockSpec((B, C, tile_n), lambda i: (0, 0, i)),
        compiler_params=pltpu.CompilerParams(
            dimension_semantics=("parallel",),
            vmem_limit_bytes=_vmem_limit([2 * x_blk_bytes, w_blk_bytes])),
    )(x, gate)
    return out


# ---------------------------------------------------------------------------
# Pure-JAX mirror of the torch forward (explicit Gram-matrix formulation).
# ---------------------------------------------------------------------------
def _reference(x, v0, Ip=2):
    w = jnp.max(x, axis=1)                    # (B, N)
    ws = w.T @ w                              # (N, N)
    v = v0.reshape(-1, 1)                     # (N, 1)
    for _ in range(Ip):
        v = ws @ v
        v = v / jnp.linalg.norm(v)
    u = w @ v                                 # (B, 1)
    w_hat = u @ v.T                           # (B, N)
    return jax.nn.sigmoid(w_hat)[:, None, :] * x


if __name__ == "__main__":
    B, C, N = 2, 4, 256
    Ip = 2                                    # module default Ip=2
    # NOTE: L=30 only matters for the unused Hankel/_batch_transformer path.

    key = jax.random.PRNGKey(0)
    kx, kv = jax.random.split(key)
    x = jax.random.normal(kx, (B, C, N), dtype=jnp.float32)
    v0 = jax.random.normal(kv, (1, N), dtype=jnp.float32)   # deterministic v init

    # tile_n=128 so the small test still exercises a multi-tile, pipelined grid.
    out = singular_spectrum_operator(x, v0, Ip=Ip, tile_n=128)
    out = jax.block_until_ready(out)

    with jax.default_matmul_precision("highest"):
        ref = _reference(x, v0, Ip=Ip)

    assert out.shape == (B, C, N)
    assert jnp.allclose(out, ref, rtol=1e-4, atol=1e-4), "mismatch vs reference"

    print("KERNEL_OK")
</pallas_src>

<mosaic_0001>
module attributes {stable_mosaic.version = 11 : i64} {
  func.func @_channel_max_kernel(%arg0: i32, %arg1: memref<2x4x128xf32, #tpu.memory_space<vmem>>, %arg2: memref<2x128xf32, #tpu.memory_space<vmem>>) attributes {dimension_semantics = [#tpu.dimension_semantics<parallel>], iteration_bounds = array<i64: 2>, scalar_prefetch = 0 : i64, scratch_operands = 0 : i64, tpu.core_type = #tpu.core_type<tc>, window_params = [{transform_indices = @transform_0, window_bounds = array<i64: 2, 4, 128>}, {transform_indices = @transform_1, window_bounds = array<i64: 2, 128>}]} {
    %c0 = arith.constant 0 : index
    %c0_0 = arith.constant 0 : index
    %c0_1 = arith.constant 0 : index
    %0 = vector.load %arg1[%c0, %c0_0, %c0_1] : memref<2x4x128xf32, #tpu.memory_space<vmem>>, vector<2x4x128xf32>
    %cst = arith.constant dense<0xFF800000> : vector<2x128xf32>
    %1 = vector.multi_reduction <maximumf>, %0, %cst [1] : vector<2x4x128xf32> to vector<2x128xf32>
    %c0_2 = arith.constant 0 : index
    %c0_3 = arith.constant 0 : index
    %2 = vector.load %arg2[%c0_2, %c0_3] : memref<2x128xf32, #tpu.memory_space<vmem>>, vector<2x128xf32>
    tpu.vector_store %arg2[%c0_2, %c0_3], %1 {strides = array<i32>} : memref<2x128xf32, #tpu.memory_space<vmem>>, vector<2x128xf32>,
    return
  }
  func.func @transform_0(%arg0: i32) -> (i32, i32, i32) {
    %c0_i32 = arith.constant 0 : i32
    %c0_i32_0 = arith.constant 0 : i32
    %c0_i32_1 = arith.constant 0 : i32
    return %c0_i32, %c0_i32_0, %arg0 : i32, i32, i32
  }
  func.func @transform_1(%arg0: i32) -> (i32, i32) {
    %c0_i32 = arith.constant 0 : i32
    %c0_i32_0 = arith.constant 0 : i32
    return %c0_i32, %arg0 : i32, i32
  }
}

</mosaic_0001>

<llo_original>
// kernel: tpu_custom_call.1
$region0: #{tpu_custom_call.1}
  #allocation0 [shape = 'u32[]', space=smem, size = 0x4, offset = 0x4, fixed_abs, tag = 'smem constant byte address 0x4 - core index']
  #allocation1 [shape = 'u32[144,128]{1,0:T(1,128)}', space=vmem, size = 0x12000, scoped, tag = 'internal scratch']
  %s0 = inlined_call_operand.hbm [shape: f32[2,4,256], index: 0, kind: input, shape index: {}]
  %s1 = inlined_call_operand.hbm [shape: f32[2,256], index: 1, kind: output, shape index: {}]
  %s2 = sld [smem:[#allocation0]]
  $region41: #{tpu_custom_call.1} parent=0
    _
  %s4 = ssub.s32 1, %s2
  %s5 = scalar_select 0, %s4, %s2
  $region1: #{tpu_custom_call.1} parent=0
    #allocation2 [shape = 'u8[8192]{0}', space=vmem, size = 0x2000, scoped, tag = 'input window, operand 0']
    #allocation3 [shape = 's32[2]{0}', space=sflag, size = 0x8, scoped, tag = 'scoped memory for tpu_custom_call.1']
    #allocation4 [shape = 's32[2]{0}', space=sflag, size = 0x8, scoped, tag = 'scoped memory for tpu_custom_call.1']
    #allocation5 [shape = 'u8[2048]{0}', space=vmem, size = 0x800, scoped, tag = 'output window, operand 0']
    %6 = vsyncpa [#allocation3], 0
    %s7 = scalar_lea.sflag [#allocation3], 1
    %8 = vsyncpa %s7, 0
    %9 = vsyncpa [#allocation4], 0
    %s10 = scalar_lea.sflag [#allocation4], 1
    %11 = vsyncpa %s10, 0
    loop: start=0, step=1, limit=4
    $region2: #{tpu_custom_call.1} parent=1 // loop_pre_header
      _
    $region3: #{tpu_custom_call.1} parent=1 // loop_header
      %s13 = sphi 0, %s17
      %p14 = scmp.ge.s32.totalorder %s13, 4
      %s23 = sphi 0, %s25
      %s26 = sphi 0, %s23
      %s27 = sphi 0, %s26
      %s43 = sphi 0, %s27
      %s49 = sphi 0, %s51
      %s52 = sphi 0, %s49
      %s53 = sphi 0, %s52
      %s69 = sphi 0, %s53
    $region4: #{tpu_custom_call.1} parent=1 // loop_header_branch
      %16 = sbr.rel (%p14) target = $region8
    $region5: #{tpu_custom_call.1} parent=1 // loop_body
      %s18 = ssub.s32 %s13, 1
      %s19 = ssub.s32 %s13, 2
      %s20 = sadd.s32 %s13, 1
      %s21 = ssub.s32 %s13, %s20
      %p22 = scmp.eq.s32.totalorder %s21, 0
      %s24 = sadd.s32 %s23, 1
      %s25 = scalar_select %p22, %s23, %s24
      %p28 = pneg %p22
      %p29 = scmp.eq.s32.totalorder %s13, 1
      %p30 = por %p28, %p29
      %p31 = scmp.ne.s32.totalorder %s23, %s26
      %p32 = scmp.eq.s32.totalorder %s13, 0
      %p33 = por %p31, %p32
      %p34 = scmp.ne.s32.totalorder %s23, %s26
      %p35 = scmp.eq.s32.totalorder %s18, 1
      %p36 = por %p34, %p35
      %p37 = scmp.ne.s32.totalorder %s26, %s27
      %p38 = scmp.eq.s32.totalorder %s18, 0
      %p39 = por %p37, %p38
      %p40 = scmp.ne.s32.totalorder %s26, %s27
      %p41 = scmp.eq.s32.totalorder %s19, 1
      %p42 = por %p40, %p41
      %p44 = scmp.ne.s32.totalorder %s27, %s43
      %p45 = scmp.eq.s32.totalorder %s19, 0
      %p46 = por %p44, %p45
      %s47 = ssub.s32 %s13, %s20
      %p48 = scmp.eq.s32.totalorder %s47, 0
      %s50 = sadd.s32 %s49, 1
      %s51 = scalar_select %p48, %s49, %s50
      %p54 = pneg %p48
      %p55 = scmp.eq.s32.totalorder %s13, 1
      %p56 = por %p54, %p55
      %p57 = scmp.ne.s32.totalorder %s49, %s52
      %p58 = scmp.eq.s32.totalorder %s13, 0
      %p59 = por %p57, %p58
      %p60 = scmp.ne.s32.totalorder %s49, %s52
      %p61 = scmp.eq.s32.totalorder %s18, 1
      %p62 = por %p60, %p61
      %p63 = scmp.ne.s32.totalorder %s52, %s53
      %p64 = scmp.eq.s32.totalorder %s18, 0
      %p65 = por %p63, %p64
      %p66 = scmp.ne.s32.totalorder %s52, %s53
      %p67 = scmp.eq.s32.totalorder %s19, 1
      %p68 = por %p66, %p67
      %p70 = scmp.ne.s32.totalorder %s53, %s69
      %p71 = scmp.eq.s32.totalorder %s19, 0
      %p72 = por %p70, %p71
      %p73 = scmp.le.s32.totalorder 1, %s13
      %p74 = scmp.lt.s32.totalorder %s13, 3
      %p75 = pnand %p73, %p74
      %p76 = pneg %p75
      // Predicated region
      $region9: #{tpu_custom_call.1} parent=5 // pred_check
        _
      $region10: #{tpu_custom_call.1} parent=5 // pred_check_branch
        %78 = sbr.rel (%p75) target = $region12
      $region11: #{tpu_custom_call.1} parent=5 // pred_region
        %s79 = ssub.s32 %s13, 1
      $region12: #{tpu_custom_call.1} parent=5 // pred_fallthru
        _
      %p80 = scmp.lt.s32.totalorder %s13, 2
      // Predicated region
      $region13: #{tpu_custom_call.1} parent=5 // pred_check
        %p81 = pneg %p80
      $region14: #{tpu_custom_call.1} parent=5 // pred_check_branch
        %83 = sbr.rel (%p81) target = $region16
      $region15: #{tpu_custom_call.1} parent=5 // pred_region
        // Predicated region
        $region17: #{tpu_custom_call.1} parent=15 // pred_check
          %p84 = pneg %p33
        $region18: #{tpu_custom_call.1} parent=15 // pred_check_branch
          %86 = sbr.rel (%p84) target = $region20
        $region19: #{tpu_custom_call.1} parent=15 // pred_region
          %s87 = sand.u32 %s23, 1
          %s88 = scalar_lea.sflag [#allocation3], %s87
          %s89 = sand.u32 %s23, 1
          %s90 = smul.addr %s89, 8
          %s91 = scalar_lea.vmem [#allocation2], %s90
          %s93 = ssub.s32 128, 128
          %94 = vsyncadd %s88, %s93
          %s95 = smul.addr %s13, 64
          %s96 = scalar_lea.hbm %s0, %s95
          %s97 = sshll.u32 %s91, 4
          %s98 = int_to_ptr.vmem [resolvable:$true] %s97
          %103 = dma.hbm_to_vmem [thread:$0]  %s96, 128, %s98, %s88, 128, 64, 4
        $region20: #{tpu_custom_call.1} parent=15 // pred_fallthru
          _
      $region16: #{tpu_custom_call.1} parent=5 // pred_fallthru
        _
      %p104 = scmp.le.s32.totalorder 1, %s13
      %p105 = scmp.lt.s32.totalorder %s13, 3
      %p106 = pnand %p104, %p105
      %p107 = pneg %p106
      // Predicated region
      $region21: #{tpu_custom_call.1} parent=5 // pred_check
        _
      $region22: #{tpu_custom_call.1} parent=5 // pred_check_branch
        %109 = sbr.rel (%p106) target = $region24
      $region23: #{tpu_custom_call.1} parent=5 // pred_region
        %s110 = ssub.s32 %s13, 1
        %s111 = sand.u32 %s26, 1
        %s112 = scalar_lea.sflag [#allocation3], %s111
        %s113 = sand.u32 %s26, 1
        %s114 = smul.addr %s113, 8
        %s115 = scalar_lea.vmem [#allocation2], %s114
        // Predicated region
        $region25: #{tpu_custom_call.1} parent=23 // pred_check
          %p116 = pneg %p39
        $region26: #{tpu_custom_call.1} parent=23 // pred_check_branch
          %118 = sbr.rel (%p116) target = $region28
        $region27: #{tpu_custom_call.1} parent=23 // pred_region
          %119 = dma.done %s112, 128
        $region28: #{tpu_custom_call.1} parent=23 // pred_fallthru
          _
        %s120 = sand.u32 %s26, 1
        %s121 = scalar_lea.sflag [#allocation3], %s120
        %s122 = sand.u32 %s26, 1
        %s123 = smul.addr %s122, 8
        %s124 = scalar_lea.vmem [#allocation2], %s123
        %p125 = pneg %p39
        %p126 = pneg %p36
        %p127 = pneg %p65
        %p128 = pneg %p62
        %s129 = sand.u32 %s52, 1
        %s130 = scalar_lea.sflag [#allocation4], %s129
        %s131 = sand.u32 %s52, 1
        %s132 = smul.addr %s131, 2
        %s133 = scalar_lea.vmem [#allocation5], %s132
        %v134 = vld [vmem:[%s115] sm:$0xf]
        %v135 = vld [vmem:[%s115 + $0x4] sm:$0xf]
        %vm136 = vcmask 1043456
        %v137 = vsel %vm136, %v134, -inf
        %v138 = vrot.slane %v137, 4
        %v139 = vmax.f32 %v137, %v138
        %v140 = vrot.slane %v139, 2
        %v141 = vmax.f32 %v139, %v140
        %v142 = vrot.slane %v141, 1
        %v143 = vmax.f32 %v141, %v142
        %v144 = vsel %vm136, %v135, -inf
        %v145 = vrot.slane %v144, 4
        %v146 = vmax.f32 %v144, %v145
        %v147 = vrot.slane %v146, 2
        %v148 = vmax.f32 %v146, %v147
        %v149 = vrot.slane %v148, 1
        %v150 = vmax.f32 %v148, %v149
        %vm153 = vcmask 1041409
        %v154 = vsel %vm153, %v150, %v143
        %156 = vst [vmem:[%s133] sm:$0x3] %v154
        %s157 = sand.u32 %s52, 1
        %s158 = scalar_lea.sflag [#allocation4], %s157
        %s159 = sand.u32 %s52, 1
        %s160 = smul.addr %s159, 2
        %s161 = scalar_lea.vmem [#allocation5], %s160
        // Predicated region
        $region29: #{tpu_custom_call.1} parent=23 // pred_check
          %p162 = pneg %p62
        $region30: #{tpu_custom_call.1} parent=23 // pred_check_branch
          %164 = sbr.rel (%p162) target = $region32
        $region31: #{tpu_custom_call.1} parent=23 // pred_region
          %s166 = ssub.s32 32, 32
          %167 = vsyncadd %s158, %s166
          %s168 = smul.addr %s18, 32
          %s169 = scalar_lea.hbm %s1, %s168
          %s171 = sshll.u32 %s161, 4
          %s172 = int_to_ptr.vmem [resolvable:$true] %s171
          %174 = dma.vmem_to_hbm [thread:$0]  %s172, 32, %s169, %s158
        $region32: #{tpu_custom_call.1} parent=23 // pred_fallthru
          _
      $region24: #{tpu_custom_call.1} parent=5 // pred_fallthru
        _
      %p175 = scmp.le.s32.totalorder 2, %s13
      // Predicated region
      $region33: #{tpu_custom_call.1} parent=5 // pred_check
        %p176 = pneg %p175
      $region34: #{tpu_custom_call.1} parent=5 // pred_check_branch
        %178 = sbr.rel (%p176) target = $region36
      $region35: #{tpu_custom_call.1} parent=5 // pred_region
        %s179 = ssub.s32 %s13, 2
        // Predicated region
        $region37: #{tpu_custom_call.1} parent=35 // pred_check
          %p180 = pneg %p68
        $region38: #{tpu_custom_call.1} parent=35 // pred_check_branch
          %182 = sbr.rel (%p180) target = $region40
        $region39: #{tpu_custom_call.1} parent=35 // pred_region
          %s183 = sand.u32 %s53, 1
          %s184 = scalar_lea.sflag [#allocation4], %s183
          %s185 = sand.u32 %s53, 1
          %s186 = smul.addr %s185, 2
          %s187 = scalar_lea.vmem [#allocation5], %s186
          %188 = dma.done %s184, 32
        $region40: #{tpu_custom_call.1} parent=35 // pred_fallthru
          _
      $region36: #{tpu_custom_call.1} parent=5 // pred_fallthru
        _
    $region6: #{tpu_custom_call.1} parent=1 // loop_footer
      %s17 = sadd.s32 1, %s13
    $region7: #{tpu_custom_call.1} parent=1 // loop_footer_branch
      %12 = sbr.rel target = $region3
    $region8: #{tpu_custom_call.1} parent=1 // loop_exit
      _
    %189 = vsyncpa [#allocation3], 1
    %s190 = scalar_lea.sflag [#allocation3], 1
    %191 = vsyncpa %s190, 1
    %192 = vsyncpa [#allocation4], 1
    %s193 = scalar_lea.sflag [#allocation4], 1
    %194 = vsyncpa %s193, 1

</llo_original>
